<compile_context>
chip_gen: v7x
topology: tpu7x:2x2x1
jax: 0.10.0
libtpu: 0.0.40
codegen_flags: <defaults>
</compile_context>

<pallas_src>
import functools

import jax
import jax.numpy as jnp
from jax.experimental import pallas as pl
from jax.experimental.pallas import tpu as pltpu

LANES = 128
MAX_BLOCK_ROWS = 4096   # (4096, 128) f32 block = 2 MiB per buffer.
NUM_PARTIALS = 2        # one partial sum per TensorCore on 2-TC chips (v7x, v4/v5p).


def _gen_loss_kernel(x_ref, out_ref, acc_ref, *, mode, n_valid, block_elems, bpp,
                     needs_mask):
    """Streams blocks, accumulates per-element loss vs target=1, emits partial sums."""
    c = pl.program_id(0)           # partial (core) index
    i = pl.program_id(1)           # block index within this partial

    @pl.when(i == 0)
    def _():
        acc_ref[...] = jnp.zeros_like(acc_ref)

    x = x_ref[...].astype(jnp.float32)

    def loss_of(v):
        if mode == "lsgan":
            # MSELoss(pred_fake, ones) -> (pred_fake - 1)^2
            return (v - 1.0) ** 2
        # BCEWithLogitsLoss(pred_fake, ones) -> softplus(-pred_fake)
        return jnp.logaddexp(0.0, -v)

    if needs_mask:
        # Logical (unclamped) block index; rem = #valid elements left in this block.
        blk = c * bpp + i
        rem = jnp.int32(n_valid) - blk * jnp.int32(block_elems)

        @pl.when(rem >= block_elems)      # interior block: unmasked fast path
        def _():
            acc_ref[...] += loss_of(x)

        @pl.when(rem < block_elems)       # edge / padding block: mask pad + OOB
        def _():
            rows_iota = jax.lax.broadcasted_iota(jnp.int32, x.shape, 0)
            cols_iota = jax.lax.broadcasted_iota(jnp.int32, x.shape, 1)
            local_idx = rows_iota * x.shape[1] + cols_iota
            mask = local_idx < rem        # rem <= 0 -> all-false -> contributes 0
            acc_ref[...] += jnp.where(mask, loss_of(x), 0.0)
    else:
        acc_ref[...] += loss_of(x)

    @pl.when(i == pl.num_programs(1) - 1)
    def _():
        s = jnp.sum(acc_ref[...])
        lane = jax.lax.broadcasted_iota(jnp.int32, out_ref.shape, 1)
        out_ref[...] = jnp.where(lane == 0, s, 0.0)   # partial sum in lane 0, rest 0


def generator_loss(pred_fake, mode="lsgan"):
    """Pallas TPU implementation of GeneratorLoss.forward(pred_fake)."""
    n_valid = int(pred_fake.size)

    # Keep original dtype (bf16 input halves HBM traffic); cast to f32 in-kernel.
    x = jnp.ravel(pred_fake)

    # Pad only up to the next lane multiple (<= 127 elems). Free (pure reshape)
    # whenever N % 128 == 0, which is the common case for NCHW activations.
    n_lane = pl.cdiv(n_valid, LANES) * LANES
    if n_lane != n_valid:
        x = jnp.pad(x, (0, n_lane - n_valid))
    rows = n_lane // LANES
    x = x.reshape(rows, LANES)

    block_rows = min(MAX_BLOCK_ROWS, rows)     # full extent when small, else 4096 (8-aligned)
    n_blocks = pl.cdiv(rows, block_rows)
    block_elems = block_rows * LANES

    # Split the block range into per-core partial sums when there is enough work.
    n_partials = NUM_PARTIALS if n_blocks >= NUM_PARTIALS else 1
    bpp = pl.cdiv(n_blocks, n_partials)        # blocks per partial

    even_split = (n_partials * bpp == n_blocks)
    needs_mask = (n_valid != n_blocks * block_elems) or (not even_split)

    if even_split:
        def in_idx(c, i):
            return (c * bpp + i, 0)
    else:
        last_blk = n_blocks - 1

        def in_idx(c, i):
            # Padding iterations clamp to the previous block -> copy elided, and
            # they are zero-masked in-kernel via rem <= 0.
            return (jnp.minimum(c * bpp + i, last_blk), 0)

    kernel = functools.partial(
        _gen_loss_kernel,
        mode=mode,
        n_valid=n_valid,
        block_elems=int(block_elems),
        bpp=int(bpp),
        needs_mask=bool(needs_mask),
    )

    itemsize = jnp.dtype(pred_fake.dtype).itemsize
    cost = pl.CostEstimate(
        flops=3 * n_valid,
        transcendentals=0 if mode == "lsgan" else 2 * n_valid,
        bytes_accessed=n_valid * itemsize + n_partials * LANES * 4,
    )

    partials = pl.pallas_call(
        kernel,
        out_shape=jax.ShapeDtypeStruct((1, n_partials * LANES), jnp.float32),
        grid_spec=pltpu.PrefetchScalarGridSpec(
            num_scalar_prefetch=0,
            grid=(n_partials, bpp),
            in_specs=[pl.BlockSpec((block_rows, LANES), in_idx)],
            out_specs=pl.BlockSpec((1, LANES), lambda c, i: (0, c)),
            scratch_shapes=[pltpu.VMEM((block_rows, LANES), jnp.float32)],
        ),
        compiler_params=pltpu.CompilerParams(
            dimension_semantics=("parallel", "arbitrary"),
        ),
        cost_estimate=cost,
    )(x)

    # Combine the per-core partial sums (non-lane-0 entries are zero) and take the mean.
    return jnp.sum(partials) / jnp.float32(n_valid)


if __name__ == "__main__":
    key = jax.random.PRNGKey(0)

    # pred_fake: e.g. a PatchGAN discriminator output, NCHW = (2, 1, 16, 16)
    pred_fake = jax.random.normal(key, (2, 1, 16, 16), dtype=jnp.float32)

    # default mode 'lsgan' -> MSELoss(pred_fake, ones_like(pred_fake))
    loss_lsgan = generator_loss(pred_fake, mode="lsgan")
    jax.block_until_ready(loss_lsgan)
    ref_lsgan = jnp.mean((pred_fake - 1.0) ** 2)
    assert jnp.allclose(loss_lsgan, ref_lsgan, rtol=1e-5, atol=1e-6), (loss_lsgan, ref_lsgan)

    # other mode -> BCEWithLogitsLoss(pred_fake, ones_like(pred_fake))
    loss_bce = generator_loss(pred_fake, mode="vanilla")
    jax.block_until_ready(loss_bce)
    ref_bce = jnp.mean(jnp.logaddexp(0.0, -pred_fake))
    assert jnp.allclose(loss_bce, ref_bce, rtol=1e-5, atol=1e-6), (loss_bce, ref_bce)

    # non-lane-aligned shape exercises the tail-mask path (210 elems)
    key2 = jax.random.PRNGKey(1)
    pred_odd = jax.random.normal(key2, (2, 3, 7, 5), dtype=jnp.float32)
    loss_odd = generator_loss(pred_odd, mode="lsgan")
    jax.block_until_ready(loss_odd)
    ref_odd = jnp.mean((pred_odd - 1.0) ** 2)
    assert jnp.allclose(loss_odd, ref_odd, rtol=1e-5, atol=1e-6), (loss_odd, ref_odd)

    # exercises the 2-partial (parallel-axis) path with a ragged edge block
    key3 = jax.random.PRNGKey(2)
    pred_mid = jax.random.normal(key3, (2, 4, 128, 520), dtype=jnp.float32)  # 2 blocks
    loss_mid = generator_loss(pred_mid, mode="lsgan")
    jax.block_until_ready(loss_mid)
    ref_mid = jnp.mean((pred_mid - 1.0) ** 2)
    assert jnp.allclose(loss_mid, ref_mid, rtol=2e-4, atol=1e-6), (loss_mid, ref_mid)

    # exercises the uneven core split (odd block count -> clamped padding iteration)
    key4 = jax.random.PRNGKey(3)
    pred_big = jax.random.normal(key4, (3, 3, 128, 384), dtype=jnp.float32)  # 3 blocks
    loss_big = generator_loss(pred_big, mode="vanilla")
    jax.block_until_ready(loss_big)
    ref_big = jnp.mean(jnp.logaddexp(0.0, -pred_big))
    assert jnp.allclose(loss_big, ref_big, rtol=2e-4, atol=1e-6), (loss_big, ref_big)

    print("KERNEL_OK")
</pallas_src>

<mosaic_0001>
module attributes {stable_mosaic.version = 11 : i64} {
  func.func @_gen_loss_kernel(%arg0: i32, %arg1: i32, %arg2: memref<4x128xf32, #tpu.memory_space<vmem>>, %arg3: memref<1x128xf32, #tpu.memory_space<vmem>>, %arg4: memref<4x128xf32, #tpu.memory_space<vmem>>) attributes {dimension_semantics = [#tpu.dimension_semantics<parallel>, #tpu.dimension_semantics<arbitrary>], iteration_bounds = array<i64: 1, 1>, scalar_prefetch = 0 : i64, scratch_operands = 1 : i64, tpu.core_type = #tpu.core_type<tc>, window_params = [{transform_indices = @transform_0, window_bounds = array<i64: 4, 128>}, {transform_indices = @transform_1, window_bounds = array<i64: 1, 128>}]} {
    %c0_i32 = arith.constant 0 : i32
    %0 = arith.cmpi eq, %arg1, %c0_i32 : i32
    %1 = arith.extui %0 : i1 to i32
    %c0_i32_0 = arith.constant 0 : i32
    %2 = arith.cmpi ne, %1, %c0_i32_0 : i32
    scf.if %2 {
      %cst_8 = arith.constant 0.000000e+00 : f32
      %13 = vector.broadcast %cst_8 : f32 to vector<4x128xf32>
      %c0_9 = arith.constant 0 : index
      %c0_10 = arith.constant 0 : index
      %14 = vector.load %arg4[%c0_9, %c0_10] : memref<4x128xf32, #tpu.memory_space<vmem>>, vector<4x128xf32>
      tpu.vector_store %arg4[%c0_9, %c0_10], %13 {strides = array<i32>} : memref<4x128xf32, #tpu.memory_space<vmem>>, vector<4x128xf32>,
    } else {
    }
    %c0 = arith.constant 0 : index
    %c0_1 = arith.constant 0 : index
    %3 = vector.load %arg2[%c0, %c0_1] : memref<4x128xf32, #tpu.memory_space<vmem>>, vector<4x128xf32>
    %c0_2 = arith.constant 0 : index
    %c0_3 = arith.constant 0 : index
    %4 = vector.load %arg4[%c0_2, %c0_3] : memref<4x128xf32, #tpu.memory_space<vmem>>, vector<4x128xf32>
    %cst = arith.constant 1.000000e+00 : f32
    %5 = vector.broadcast %cst : f32 to vector<4x128xf32>
    %6 = arith.subf %3, %5 : vector<4x128xf32>
    %7 = arith.mulf %6, %6 : vector<4x128xf32>
    %8 = arith.addf %4, %7 : vector<4x128xf32>
    %c0_4 = arith.constant 0 : index
    %c0_5 = arith.constant 0 : index
    %9 = vector.load %arg4[%c0_4, %c0_5] : memref<4x128xf32, #tpu.memory_space<vmem>>, vector<4x128xf32>
    tpu.vector_store %arg4[%c0_4, %c0_5], %8 {strides = array<i32>} : memref<4x128xf32, #tpu.memory_space<vmem>>, vector<4x128xf32>,
    %c0_i32_6 = arith.constant 0 : i32
    %10 = arith.cmpi eq, %arg1, %c0_i32_6 : i32
    %11 = arith.extui %10 : i1 to i32
    %c0_i32_7 = arith.constant 0 : i32
    %12 = arith.cmpi ne, %11, %c0_i32_7 : i32
    scf.if %12 {
      %c0_8 = arith.constant 0 : index
      %c0_9 = arith.constant 0 : index
      %13 = vector.load %arg4[%c0_8, %c0_9] : memref<4x128xf32, #tpu.memory_space<vmem>>, vector<4x128xf32>
      %14 = vector.shape_cast %13 : vector<4x128xf32> to vector<1x4x128xf32>
      %cst_10 = arith.constant dense<0.000000e+00> : vector<1xf32>
      %15 = vector.multi_reduction <add>, %14, %cst_10 [1, 2] : vector<1x4x128xf32> to vector<1xf32>
      %16 = vector.shape_cast %15 : vector<1xf32> to vector<1x1x1xf32>
      %17 = vector.extract %16[0, 0, 0] : f32 from vector<1x1x1xf32>
      %18 = tpu.iota {dimensions = array<i32: 1>} : vector<1x128xi32>
      %c0_i32_11 = arith.constant 0 : i32
      %19 = vector.broadcast %c0_i32_11 : i32 to vector<1x128xi32>
      %20 = arith.cmpi eq, %18, %19 : vector<1x128xi32>
      %cst_12 = arith.constant 0.000000e+00 : f32
      %21 = vector.broadcast %17 : f32 to vector<1x128xf32>
      %22 = vector.broadcast %cst_12 : f32 to vector<1x128xf32>
      %23 = arith.select %20, %21, %22 : vector<1x128xi1>, vector<1x128xf32>
      %c0_13 = arith.constant 0 : index
      %c0_14 = arith.constant 0 : index
      %24 = vector.load %arg3[%c0_13, %c0_14] : memref<1x128xf32, #tpu.memory_space<vmem>>, vector<1x128xf32>
      tpu.vector_store %arg3[%c0_13, %c0_14], %23 {strides = array<i32>} : memref<1x128xf32, #tpu.memory_space<vmem>>, vector<1x128xf32>,
    } else {
    }
    return
  }
  func.func @transform_0(%arg0: i32, %arg1: i32) -> (i32, i32) {
    %c1_i32 = arith.constant 1 : i32
    %0 = arith.muli %arg0, %c1_i32 : i32
    %1 = arith.addi %0, %arg1 : i32
    %c0_i32 = arith.constant 0 : i32
    %c0_i32_0 = arith.constant 0 : i32
    return %1, %c0_i32 : i32, i32
  }
  func.func @transform_1(%arg0: i32, %arg1: i32) -> (i32, i32) {
    %c0_i32 = arith.constant 0 : i32
    %c0_i32_0 = arith.constant 0 : i32
    return %c0_i32, %arg0 : i32, i32
  }
}

</mosaic_0001>

<llo_original>
// kernel: tpu_custom_call.1
$region0: #{tpu_custom_call.1}
  #allocation0 [shape = 'u32[]', space=smem, size = 0x4, offset = 0x4, fixed_abs, tag = 'smem constant byte address 0x4 - core index']
  #allocation1 [shape = 'u32[144,128]{1,0:T(1,128)}', space=vmem, size = 0x12000, scoped, tag = 'internal scratch']
  #allocation2 [shape = 'f32[4,128]{1,0:T(4,128)}', space=vmem, size = 0x800, scoped, tag = 'scratch operand']
  %s0 = inlined_call_operand.hbm [shape: f32[4,128], index: 0, kind: input, shape index: {}]
  %s1 = inlined_call_operand.hbm [shape: f32[1,128], index: 1, kind: output, shape index: {}]
  %s2 = sld [smem:[#allocation0]]
  $region26: #{tpu_custom_call.1} parent=0
    _
  %s4 = ssub.s32 1, %s2
  %s5 = scalar_select 0, %s4, %s2
  $region1: #{tpu_custom_call.1} parent=0
    #allocation3 [shape = 'u8[2048]{0}', space=vmem, size = 0x800, scoped, tag = 'input window, operand 0, single buffered']
    #allocation4 [shape = 's32[1]{0}', space=sflag, size = 0x4, scoped, tag = 'scoped memory for tpu_custom_call.1']
    #allocation5 [shape = 's32[1]{0}', space=sflag, size = 0x4, scoped, tag = 'scoped memory for tpu_custom_call.1']
    #allocation6 [shape = 'u8[512]{0}', space=vmem, size = 0x400, scoped, tag = 'output window, operand 0, single buffered']
    %6 = vsyncpa [#allocation4], 0
    %7 = vsyncpa [#allocation5], 0
    // Predicated region
    $region2: #{tpu_custom_call.1} parent=1 // pred_check
      _
    $region3: #{tpu_custom_call.1} parent=1 // pred_check_branch
      %9 = sbr.rel (0) target = $region5
    $region4: #{tpu_custom_call.1} parent=1 // pred_region
      %s10 = sadd.s32 0, 0
      %s12 = ssub.s32 64, 64
      %13 = vsyncadd [#allocation4], %s12
      %s14 = smul.addr %s10, 64
      %s15 = scalar_lea.hbm %s0, %s14
      %s17 = sshll.u32 [#allocation3], 4
      %s18 = int_to_ptr.vmem [resolvable:$true] %s17
      %20 = dma.hbm_to_vmem [thread:$0]  %s15, 64, %s18, [#allocation4]
    $region5: #{tpu_custom_call.1} parent=1 // pred_fallthru
      _
    // Predicated region
    $region6: #{tpu_custom_call.1} parent=1 // pred_check
      _
    $region7: #{tpu_custom_call.1} parent=1 // pred_check_branch
      %22 = sbr.rel (0) target = $region9
    $region8: #{tpu_custom_call.1} parent=1 // pred_region
      %23 = dma.done [#allocation4], 64
    $region9: #{tpu_custom_call.1} parent=1 // pred_fallthru
      _
    %s24 = sadd.s32 0, 0
    %p25 = scmp.eq.s32.totalorder 0, 0
    // Predicated region
    $region10: #{tpu_custom_call.1} parent=1 // pred_check
      %p26 = pneg %p25
    $region11: #{tpu_custom_call.1} parent=1 // pred_check_branch
      %28 = sbr.rel (%p26) target = $region13
    $region12: #{tpu_custom_call.1} parent=1 // pred_region
      %29 = vst [vmem:[#allocation2] sm:$0xf] 0.0
    $region13: #{tpu_custom_call.1} parent=1 // pred_fallthru
      _
    %v30 = vld [vmem:[#allocation3] sm:$0xf]
    %v31 = vld [vmem:[#allocation2] sm:$0xf]
    %v32 = vsub.f32 %v30, 1.0
    %v33 = vmul.f32 %v32, %v32
    %v34 = vadd.f32 %v31, %v33
    %35 = vst [vmem:[#allocation2] sm:$0xf] %v34
    // Predicated region
    $region14: #{tpu_custom_call.1} parent=1 // pred_check
      %p36 = pneg %p25
    $region15: #{tpu_custom_call.1} parent=1 // pred_check_branch
      %38 = sbr.rel (%p36) target = $region17
    $region16: #{tpu_custom_call.1} parent=1 // pred_region
      %v39 = vld [vmem:[#allocation2] sm:$0xf]
      %vm40 = vcmask 1043456
      %v41 = vsel %vm40, %v39, 0.0
      %42 = vadd.xlane.f32.xlu0 %v41
      %v43 = vpop.xlane.xlu0 %42
      %v44 = vrot.slane %v43, 4
      %v45 = vadd.f32 %v43, %v44
      %v46 = vrot.slane %v45, 2
      %v47 = vadd.f32 %v45, %v46
      %v48 = vrot.slane %v47, 1
      %v49 = vadd.f32 %v47, %v48
      %s50 = vtos %v49
      %v51 = vlaneseq
      %v52 = vand.u32 %v51, 127
      %vm53 = vcmp.eq.s32.totalorder %v52, 0
      %v54 = vstv %s50
      %v55 = vsel %vm53, %v54, 0.0
      %56 = vst [vmem:[#allocation6] sm:$0x1] %v55
    $region17: #{tpu_custom_call.1} parent=1 // pred_fallthru
      _
    // Predicated region
    $region18: #{tpu_custom_call.1} parent=1 // pred_check
      _
    $region19: #{tpu_custom_call.1} parent=1 // pred_check_branch
      %58 = sbr.rel (0) target = $region21
    $region20: #{tpu_custom_call.1} parent=1 // pred_region
      %s60 = ssub.s32 16, 16
      %61 = vsyncadd [#allocation5], %s60
      %s63 = sshll.u32 [#allocation6], 4
      %s64 = int_to_ptr.vmem [resolvable:$true] %s63
      %66 = dma.vmem_to_hbm [thread:$0]  %s64, 16, %s1, [#allocation5]
    $region21: #{tpu_custom_call.1} parent=1 // pred_fallthru
      _
    // Predicated region
    $region22: #{tpu_custom_call.1} parent=1 // pred_check
      _
    $region23: #{tpu_custom_call.1} parent=1 // pred_check_branch
      %68 = sbr.rel (0) target = $region25
    $region24: #{tpu_custom_call.1} parent=1 // pred_region
      %69 = dma.done [#allocation5], 16
    $region25: #{tpu_custom_call.1} parent=1 // pred_fallthru
      _
    %70 = vsyncpa [#allocation4], 1
    %71 = vsyncpa [#allocation5], 1

</llo_original>
